<compile_context>
chip_gen: v6e
topology: v6e:2x2x1
jax: 0.10.0
libtpu: 0.0.40
codegen_flags: <defaults>
</compile_context>

<pallas_src>
import jax
import jax.numpy as jnp
from jax.experimental import pallas as pl
from jax.experimental.pallas import tpu as pltpu


# ---------------------------------------------------------------------------
# Kernel 1: one-time full concat (template build / cold path).
# ---------------------------------------------------------------------------

def _concat_kernel_generic(prefix_ref, ctx_ref, suffix_ref, out_ref):
    # prefix_ref: (C_BLK, 1, D)      suffix_ref: (C_BLK, n_suf, D)
    # ctx_ref:    (n_ctx, D)  shared context, constant block index -> VMEM-resident
    # out_ref:    (C_BLK, n_tkn, D)
    od = out_ref.dtype
    n_ctx = ctx_ref.shape[0]
    out_ref[:, 0:1, :] = prefix_ref[...].astype(od)
    out_ref[:, 1 + n_ctx:, :] = suffix_ref[...].astype(od)
    # Replay the same resident ctx vregs per class instead of materializing a
    # (C_BLK, n_ctx, D) broadcast (avoids vreg spills, review #4).
    ctx_blk = ctx_ref[...].astype(od)[None, :, :]          # (1, n_ctx, D)

    @pl.loop(0, out_ref.shape[0])
    def _(c):
        out_ref[pl.ds(c, 1), 1:1 + n_ctx, :] = ctx_blk


def _concat_kernel_csc(prefix_ref, ctx_ref, suffix_ref, out_ref):
    # Class-specific context: ctx_ref is (C_BLK, n_ctx, D).
    od = out_ref.dtype
    n_ctx = ctx_ref.shape[1]
    out_ref[:, 0:1, :] = prefix_ref[...].astype(od)
    out_ref[:, 1:1 + n_ctx, :] = ctx_ref[...].astype(od)
    out_ref[:, 1 + n_ctx:, :] = suffix_ref[...].astype(od)


def build_prompts(prefix, ctx, suffix, *, class_block=None, vmem_budget_bytes=None):
    """Full concat (cold path).  Run once; reuse the result as a template."""
    n_cls, n_pre, d = prefix.shape
    assert n_pre == 1, prefix.shape
    assert suffix.dtype == prefix.dtype, (suffix.dtype, prefix.dtype)
    n_suf = suffix.shape[1]
    csc = (ctx.ndim == 3)
    if csc:
        assert ctx.shape[0] == n_cls, (ctx.shape, n_cls)
    n_ctx = ctx.shape[1] if csc else ctx.shape[0]
    n_tkn = 1 + n_ctx + n_suf

    out_dtype = prefix.dtype
    out_isz = jnp.dtype(out_dtype).itemsize
    ctx_isz = jnp.dtype(ctx.dtype).itemsize

    # --- class_block from a generation-safe VMEM budget (reviews #6/#8) -------
    if vmem_budget_bytes is None:
        try:
            cap = int(pltpu.get_tpu_info().vmem_capacity_bytes)
        except Exception:
            cap = 64 << 20                       # v7x per-TC physical VMEM
        vmem_budget_bytes = min(12 << 20, cap // 4)

    if class_block is None:
        per_cls = 2 * ((1 + n_suf) * d * out_isz          # prefix + suffix tiles
                       + n_tkn * d * out_isz              # output tile
                       + (n_ctx * d * ctx_isz if csc else 0))
        class_block = max(1, vmem_budget_bytes // per_cls)
    class_block = int(max(1, min(class_block, n_cls)))

    steps = int(pl.cdiv(n_cls, class_block))
    if steps > 1 and steps % 2 == 1:
        # Even step count -> balanced split across the 2 TCs on v7x; harmless on
        # single-TC v5e/v6e.  (No forced >=2 steps any more, review #7/#8.)
        class_block = int(max(1, pl.cdiv(n_cls, steps + 1)))
        steps = int(pl.cdiv(n_cls, class_block))

    if csc:
        kernel = _concat_kernel_csc
        ctx_spec = pl.BlockSpec((class_block, n_ctx, d), lambda i: (i, 0, 0))
        ctx_blk_bytes = class_block * n_ctx * d * ctx_isz
    else:
        kernel = _concat_kernel_generic
        # Constant block index -> the shared ctx stays resident in VMEM.
        ctx_spec = pl.BlockSpec((n_ctx, d), lambda i: (0, 0))
        ctx_blk_bytes = n_ctx * d * ctx_isz

    needed = 2 * (class_block * (1 + n_suf) * d * out_isz
                  + class_block * n_tkn * d * out_isz
                  + ctx_blk_bytes)
    vmem_limit = int(min(64 << 20, max(32 << 20, int(1.25 * needed))))

    bytes_accessed = int(prefix.size * out_isz + suffix.size * out_isz
                         + ctx.size * ctx_isz + n_cls * n_tkn * d * out_isz)

    return pl.pallas_call(
        kernel,
        out_shape=jax.ShapeDtypeStruct((n_cls, n_tkn, d), out_dtype),
        grid_spec=pltpu.PrefetchScalarGridSpec(
            num_scalar_prefetch=0,
            grid=(steps,),
            in_specs=[
                pl.BlockSpec((class_block, 1, d), lambda i: (i, 0, 0)),      # prefix
                ctx_spec,                                                    # ctx
                pl.BlockSpec((class_block, n_suf, d), lambda i: (i, 0, 0)),  # suffix
            ],
            out_specs=pl.BlockSpec((class_block, n_tkn, d), lambda i: (i, 0, 0)),
        ),
        compiler_params=pltpu.CompilerParams(
            dimension_semantics=("parallel",),
            vmem_limit_bytes=vmem_limit,
        ),
        cost_estimate=pl.CostEstimate(flops=0, transcendentals=0,
                                      bytes_accessed=bytes_accessed),
    )(prefix, ctx, suffix)


# ---------------------------------------------------------------------------
# Kernel 2: steady-state path — rewrite only the ctx token band in place.
# The template (a previously built prompts array; prefix/suffix bands frozen) is
# aliased to the output, so prefix/suffix are never re-read or re-written.
# ---------------------------------------------------------------------------

def _update_ctx_generic_kernel(ctx_ref, tmpl_ref, out_ref, stage_ref, sem_ref):
    # ctx_ref:   (n_ctx, D) VMEM, native ctx dtype (cast in-kernel)
    # tmpl_ref:  (n_cls, n_tkn, D) HBM, aliased to out_ref -> intentionally unused
    # out_ref:   (n_cls, n_tkn, D) HBM (raw ref; written via DMA only)
    # stage_ref: (c_rep, n_ctx, D) VMEM scratch in out dtype
    # sem_ref:   (n_blocks,) DMA semaphores
    del tmpl_ref
    n_cls = out_ref.shape[0]
    c_rep, n_ctx, _ = stage_ref.shape
    n_blocks = sem_ref.shape[0]

    # Fill the replicated staging block by replaying the same resident ctx vregs.
    ctx_blk = ctx_ref[...].astype(stage_ref.dtype)[None, :, :]   # (1, n_ctx, D)

    @pl.loop(0, c_rep)
    def _(c):
        stage_ref[pl.ds(c, 1), :, :] = ctx_blk

    # One strided DMA per class block; the last block re-starts at n_cls - c_rep
    # (overlapping writes carry identical values), so every size stays static.
    copies = []
    for b in range(n_blocks):
        c0 = min(b * c_rep, n_cls - c_rep)
        cp = pltpu.make_async_copy(
            stage_ref,
            out_ref.at[pl.ds(c0, c_rep), pl.ds(1, n_ctx), :],
            sem_ref.at[b])
        cp.start()
        copies.append(cp)
    for cp in copies:
        cp.wait()


def _update_ctx_csc_kernel(ctx_ref, tmpl_ref, out_ref, in_stage, out_stage, sem_ref):
    # ctx_ref:   (n_cls, n_ctx, D) HBM, native dtype
    # tmpl_ref:  aliased to out_ref -> intentionally unused
    # out_ref:   (n_cls, n_tkn, D) HBM
    # in_stage:  (c_blk, n_ctx, D) VMEM, ctx dtype
    # out_stage: (c_blk, n_ctx, D) VMEM, out dtype
    # sem_ref:   (2,) DMA semaphores
    del tmpl_ref
    n_cls = out_ref.shape[0]
    c_blk, n_ctx, _ = in_stage.shape
    n_blocks = (n_cls + c_blk - 1) // c_blk
    # ctx is tiny (a few hundred KiB at most), so a serial load/cast/store per
    # block is already far below the HBM roofline; no double-buffering needed.
    for b in range(n_blocks):
        c0 = min(b * c_blk, n_cls - c_blk)
        ld = pltpu.make_async_copy(ctx_ref.at[pl.ds(c0, c_blk), :, :],
                                   in_stage, sem_ref.at[0])
        ld.start(); ld.wait()
        if in_stage.dtype == out_stage.dtype:
            src = in_stage
        else:
            out_stage[...] = in_stage[...].astype(out_stage.dtype)
            src = out_stage
        st = pltpu.make_async_copy(src,
                                   out_ref.at[pl.ds(c0, c_blk), pl.ds(1, n_ctx), :],
                                   sem_ref.at[1])
        st.start(); st.wait()


def update_ctx(prompts_template, ctx, *, class_rep=64):
    """Steady-state forward: rewrite only out[:, 1:1+n_ctx, :] with `ctx`.

    `prompts_template` is a prompts array from a previous build_prompts/update_ctx
    call (prefix/suffix bands already correct).  It is aliased to the output, so
    only ~n_cls*n_ctx*D bytes of HBM are touched.
    """
    n_cls, n_tkn, d = prompts_template.shape
    out_dtype = prompts_template.dtype
    csc = (ctx.ndim == 3)
    n_ctx = ctx.shape[1] if csc else ctx.shape[0]
    assert 1 + n_ctx < n_tkn, (n_ctx, n_tkn)
    if csc:
        assert ctx.shape[0] == n_cls, (ctx.shape, n_cls)

    c_blk = int(min(class_rep, n_cls))
    n_blocks = (n_cls + c_blk - 1) // c_blk

    bytes_accessed = int(ctx.size * jnp.dtype(ctx.dtype).itemsize
                         + n_cls * n_ctx * d * jnp.dtype(out_dtype).itemsize)

    if csc:
        kernel = _update_ctx_csc_kernel
        in_specs = [pl.BlockSpec(memory_space=pl.ANY),            # ctx (HBM)
                    pl.BlockSpec(memory_space=pl.ANY)]            # template (aliased)
        scratch = [pltpu.VMEM((c_blk, n_ctx, d), ctx.dtype),
                   pltpu.VMEM((c_blk, n_ctx, d), out_dtype),
                   pltpu.SemaphoreType.DMA((2,))]
    else:
        kernel = _update_ctx_generic_kernel
        in_specs = [pl.BlockSpec((n_ctx, d), lambda i: (0, 0)),   # ctx -> VMEM
                    pl.BlockSpec(memory_space=pl.ANY)]            # template (aliased)
        scratch = [pltpu.VMEM((c_blk, n_ctx, d), out_dtype),
                   pltpu.SemaphoreType.DMA((n_blocks,))]

    return pl.pallas_call(
        kernel,
        out_shape=jax.ShapeDtypeStruct((n_cls, n_tkn, d), out_dtype),
        grid_spec=pltpu.PrefetchScalarGridSpec(
            num_scalar_prefetch=0,
            grid=(1,),
            in_specs=in_specs,
            out_specs=pl.BlockSpec(memory_space=pl.ANY),
            scratch_shapes=scratch,
        ),
        input_output_aliases={1: 0},       # template -> prompts (in-place band update)
        compiler_params=pltpu.CompilerParams(
            dimension_semantics=("arbitrary",)),
        cost_estimate=pl.CostEstimate(flops=0, transcendentals=0,
                                      bytes_accessed=bytes_accessed),
    )(ctx, prompts_template)


# ---------------------------------------------------------------------------
# Module-level forward (matches PromptLearner.forward()).
# ---------------------------------------------------------------------------

def prompt_learner_forward(prefix, ctx, suffix, *, template=None):
    """prompts = concat([prefix, ctx, suffix], axis=1).

    If `template` (a previously returned prompts array built from the same
    frozen prefix/suffix) is supplied, only the learnable ctx band is rewritten
    in place (aliased output) — the per-training-step fast path.
    """
    if template is None:
        return build_prompts(prefix, ctx, suffix)
    return update_ctx(template, ctx)


def _ref_forward(prefix, ctx, suffix):
    """Pure-JAX reference of PromptLearner.forward()."""
    out_dtype = prefix.dtype
    ctx = ctx.astype(out_dtype)
    if ctx.ndim == 2:
        ctx = jnp.broadcast_to(ctx[None, :, :], (prefix.shape[0],) + ctx.shape)
    return jnp.concatenate([prefix, ctx, suffix.astype(out_dtype)], axis=1)


if __name__ == "__main__":
    # Small shapes consistent with the module (CLIP uses n_tkn=77, D=512).
    n_cls, n_ctx, ctx_dim, n_tkn = 4, 4, 128, 16
    n_suf = n_tkn - 1 - n_ctx

    key = jax.random.PRNGKey(0)
    k_ctx, k_pre, k_suf, k_ctx2 = jax.random.split(key, 4)

    # nn.init.normal_(ctx_vectors, std=0.02) -- generic context (CSC=False).
    ctx = (0.02 * jax.random.normal(k_ctx, (n_ctx, ctx_dim))).astype(jnp.float32)
    # Synthetic frozen token embeddings (real module: clip_model.token_embedding).
    prefix = jax.random.normal(k_pre, (n_cls, 1, ctx_dim), jnp.float32)
    suffix = jax.random.normal(k_suf, (n_cls, n_suf, ctx_dim), jnp.float32)

    # 1) Cold path: build full prompts (generic context).
    p1 = jax.block_until_ready(prompt_learner_forward(prefix, ctx, suffix))
    assert p1.shape == (n_cls, n_tkn, ctx_dim) and p1.dtype == jnp.float32
    assert jnp.allclose(p1, _ref_forward(prefix, ctx, suffix)), "generic build mismatch"

    # 2) Steady state: new ctx, reuse prompts as the template (ctx band only).
    ctx_new = (0.02 * jax.random.normal(k_ctx2, (n_ctx, ctx_dim))).astype(jnp.float32)
    p2 = jax.block_until_ready(
        prompt_learner_forward(prefix, ctx_new, suffix, template=p1))
    assert jnp.allclose(p2, _ref_forward(prefix, ctx_new, suffix)), "generic update mismatch"
    # NOTE: p1 may have been donated into p2; it is not used again below.

    # 3) Class-specific context (CSC): build + steady-state update.
    ctx_csc = (0.02 * jax.random.normal(k_ctx, (n_cls, n_ctx, ctx_dim))).astype(jnp.float32)
    p3 = jax.block_until_ready(prompt_learner_forward(prefix, ctx_csc, suffix))
    assert jnp.allclose(p3, _ref_forward(prefix, ctx_csc, suffix)), "CSC build mismatch"
    ctx_csc2 = ctx_csc + 0.01
    p4 = jax.block_until_ready(
        prompt_learner_forward(prefix, ctx_csc2, suffix, template=p3))
    assert jnp.allclose(p4, _ref_forward(prefix, ctx_csc2, suffix)), "CSC update mismatch"

    # 4) Ragged n_cls (not divisible by class_block) on the build path.
    n_cls2 = 5
    k_p2, k_s2 = jax.random.split(jax.random.PRNGKey(1))
    prefix2 = jax.random.normal(k_p2, (n_cls2, 1, ctx_dim), jnp.float32)
    suffix2 = jax.random.normal(k_s2, (n_cls2, n_suf, ctx_dim), jnp.float32)
    p5 = jax.block_until_ready(build_prompts(prefix2, ctx, suffix2, class_block=2))
    assert jnp.allclose(p5, _ref_forward(prefix2, ctx, suffix2)), "ragged n_cls mismatch"

    # 5) bf16 embeddings with an f32 ctx parameter (casts happen in-kernel).
    prefix_bf = prefix.astype(jnp.bfloat16)
    suffix_bf = suffix.astype(jnp.bfloat16)
    p6 = jax.block_until_ready(prompt_learner_forward(prefix_bf, ctx, suffix_bf))
    assert p6.dtype == jnp.bfloat16
    assert jnp.allclose(p6.astype(jnp.float32),
                        _ref_forward(prefix_bf, ctx, suffix_bf).astype(jnp.float32)), \
        "bf16 build mismatch"
    p7 = jax.block_until_ready(
        prompt_learner_forward(prefix_bf, ctx_new, suffix_bf, template=p6))
    assert p7.dtype == jnp.bfloat16
    assert jnp.allclose(p7.astype(jnp.float32),
                        _ref_forward(prefix_bf, ctx_new, suffix_bf).astype(jnp.float32)), \
        "bf16 update mismatch"

    print("KERNEL_OK")
</pallas_src>

<mosaic_0001>
module attributes {stable_mosaic.version = 11 : i64} {
  func.func @_concat_kernel_generic(%arg0: i32, %arg1: memref<4x1x128xf32, #tpu.memory_space<vmem>>, %arg2: memref<4x128xf32, #tpu.memory_space<vmem>>, %arg3: memref<4x11x128xf32, #tpu.memory_space<vmem>>, %arg4: memref<4x16x128xf32, #tpu.memory_space<vmem>>) attributes {dimension_semantics = [#tpu.dimension_semantics<parallel>], iteration_bounds = array<i64: 1>, scalar_prefetch = 0 : i64, scratch_operands = 0 : i64, tpu.core_type = #tpu.core_type<tc>, window_params = [{transform_indices = @transform_0, window_bounds = array<i64: 4, 1, 128>}, {pipeline_mode = #tpu.pipeline_mode<synchronous>, transform_indices = @transform_1, window_bounds = array<i64: 4, 128>}, {transform_indices = @transform_2, window_bounds = array<i64: 4, 11, 128>}, {transform_indices = @transform_3, window_bounds = array<i64: 4, 16, 128>}]} {
    %c0 = arith.constant 0 : index
    %c0_0 = arith.constant 0 : index
    %c0_1 = arith.constant 0 : index
    %0 = vector.load %arg1[%c0, %c0_0, %c0_1] : memref<4x1x128xf32, #tpu.memory_space<vmem>>, vector<4x1x128xf32>
    %c0_2 = arith.constant 0 : index
    %c0_3 = arith.constant 0 : index
    %c0_4 = arith.constant 0 : index
    %1 = vector.load %arg4[%c0_2, %c0_3, %c0_4] : memref<4x16x128xf32, #tpu.memory_space<vmem>>, vector<4x1x128xf32>
    tpu.vector_store %arg4[%c0_2, %c0_3, %c0_4], %0 {strides = array<i32>} : memref<4x16x128xf32, #tpu.memory_space<vmem>>, vector<4x1x128xf32>,
    %c0_5 = arith.constant 0 : index
    %c0_6 = arith.constant 0 : index
    %c0_7 = arith.constant 0 : index
    %2 = vector.load %arg3[%c0_5, %c0_6, %c0_7] : memref<4x11x128xf32, #tpu.memory_space<vmem>>, vector<4x11x128xf32>
    %c0_8 = arith.constant 0 : index
    %c5 = arith.constant 5 : index
    %c0_9 = arith.constant 0 : index
    %3 = vector.load %arg4[%c0_8, %c5, %c0_9] : memref<4x16x128xf32, #tpu.memory_space<vmem>>, vector<4x11x128xf32>
    tpu.vector_store %arg4[%c0_8, %c5, %c0_9], %2 {strides = array<i32>} : memref<4x16x128xf32, #tpu.memory_space<vmem>>, vector<4x11x128xf32>,
    %c0_10 = arith.constant 0 : index
    %c0_11 = arith.constant 0 : index
    %4 = vector.load %arg2[%c0_10, %c0_11] : memref<4x128xf32, #tpu.memory_space<vmem>>, vector<4x128xf32>
    %5 = vector.shape_cast %4 : vector<4x128xf32> to vector<1x4x128xf32>
    %c0_i32 = arith.constant 0 : i32
    %c4_i32 = arith.constant 4 : i32
    %6 = arith.addi %c0_i32, %c4_i32 : i32
    %c1_i32 = arith.constant 1 : i32
    scf.for %arg5 = %c0_i32 to %6 step %c1_i32  : i32 {
      %c1_i32_13 = arith.constant 1 : i32
      %7 = arith.muli %arg5, %c1_i32_13 : i32
      %c0_i32_14 = arith.constant 0 : i32
      %8 = arith.addi %c0_i32_14, %7 : i32
      %9 = arith.index_cast %8 : i32 to index
      %c1 = arith.constant 1 : index
      %c0_15 = arith.constant 0 : index
      %10 = vector.load %arg4[%9, %c1, %c0_15] : memref<4x16x128xf32, #tpu.memory_space<vmem>>, vector<1x4x128xf32>
      tpu.vector_store %arg4[%9, %c1, %c0_15], %5 {strides = array<i32>} : memref<4x16x128xf32, #tpu.memory_space<vmem>>, vector<1x4x128xf32>,
    }
    %c4_i32_12 = arith.constant 4 : i32
    return
  }
  func.func @transform_0(%arg0: i32) -> (i32, i32, i32) {
    %c0_i32 = arith.constant 0 : i32
    %c0_i32_0 = arith.constant 0 : i32
    %c0_i32_1 = arith.constant 0 : i32
    return %arg0, %c0_i32, %c0_i32_0 : i32, i32, i32
  }
  func.func @transform_1(%arg0: i32) -> (i32, i32) {
    %c0_i32 = arith.constant 0 : i32
    %c0_i32_0 = arith.constant 0 : i32
    %c0_i32_1 = arith.constant 0 : i32
    return %c0_i32, %c0_i32_0 : i32, i32
  }
  func.func @transform_2(%arg0: i32) -> (i32, i32, i32) {
    %c0_i32 = arith.constant 0 : i32
    %c0_i32_0 = arith.constant 0 : i32
    %c0_i32_1 = arith.constant 0 : i32
    return %arg0, %c0_i32, %c0_i32_0 : i32, i32, i32
  }
  func.func @transform_3(%arg0: i32) -> (i32, i32, i32) {
    %c0_i32 = arith.constant 0 : i32
    %c0_i32_0 = arith.constant 0 : i32
    %c0_i32_1 = arith.constant 0 : i32
    return %arg0, %c0_i32, %c0_i32_0 : i32, i32, i32
  }
}

</mosaic_0001>

<llo_original>
// kernel: tpu_custom_call.1
$region0: #{tpu_custom_call.1}
  #allocation0 [shape = 'u32[]', space=smem, size = 0x4, offset = 0x4, fixed_abs, tag = 'smem constant byte address 0x4 - core index']
  #allocation1 [shape = 'u32[144,128]{1,0:T(1,128)}', space=vmem, size = 0x12000, scoped, tag = 'internal scratch']
  %s0 = inlined_call_operand.vmem [shape: f32[4,1,128], index: 0, kind: input, shape index: {}]
  %s1 = inlined_call_operand.vmem [shape: f32[4,128], index: 1, kind: input, shape index: {}]
  %s2 = inlined_call_operand.vmem [shape: f32[4,11,128], index: 2, kind: input, shape index: {}]
  %s3 = inlined_call_operand.hbm [shape: f32[4,16,128], index: 3, kind: output, shape index: {}]
  %s4 = sld [smem:[#allocation0]]
  $region29: #{tpu_custom_call.1} parent=0
    _
  %s6 = ssub.s32 1, %s4
  %s7 = scalar_select 0, %s6, %s4
  $region1: #{tpu_custom_call.1} parent=0
    #allocation2 [shape = 'u8[32768]{0}', space=vmem, size = 0x8000, scoped, tag = 'output window, operand 0, single buffered']
    #allocation3 [shape = 's32[1]{0}', space=sflag, size = 0x4, scoped, tag = 'scoped memory for tpu_custom_call.1']
    %8 = vsyncpa [#allocation3], 0
    // Predicated region
    $region2: #{tpu_custom_call.1} parent=1 // pred_check
      _
    $region3: #{tpu_custom_call.1} parent=1 // pred_check_branch
      %10 = sbr.rel (0) target = $region5
    $region4: #{tpu_custom_call.1} parent=1 // pred_region
      _
    $region5: #{tpu_custom_call.1} parent=1 // pred_fallthru
      _
    // Predicated region
    $region6: #{tpu_custom_call.1} parent=1 // pred_check
      _
    $region7: #{tpu_custom_call.1} parent=1 // pred_check_branch
      %12 = sbr.rel (0) target = $region9
    $region8: #{tpu_custom_call.1} parent=1 // pred_region
      _
    $region9: #{tpu_custom_call.1} parent=1 // pred_fallthru
      _
    // Predicated region
    $region10: #{tpu_custom_call.1} parent=1 // pred_check
      _
    $region11: #{tpu_custom_call.1} parent=1 // pred_check_branch
      %14 = sbr.rel (0) target = $region13
    $region12: #{tpu_custom_call.1} parent=1 // pred_region
      _
    $region13: #{tpu_custom_call.1} parent=1 // pred_fallthru
      _
    %v15 = vld [vmem:[%s0] sm:$0x1]
    %v16 = vld [vmem:[%s0 + $0x1] sm:$0x1]
    %v17 = vld [vmem:[%s0 + $0x2] sm:$0x1]
    %v18 = vld [vmem:[%s0 + $0x3] sm:$0x1]
    %19 = vst [vmem:[#allocation2] sm:$0x1] %v15
    %20 = vst [vmem:[#allocation2 + $0x10] sm:$0x1] %v16
    %21 = vst [vmem:[#allocation2 + $0x20] sm:$0x1] %v17
    %22 = vst [vmem:[#allocation2 + $0x30] sm:$0x1] %v18
    %v23 = vld [vmem:[%s2] sm:$0xff]
    %v24 = vld [vmem:[%s2 + $0x8] sm:$0x7]
    %v25 = vld [vmem:[%s2 + $0x10] sm:$0xff]
    %v26 = vld [vmem:[%s2 + $0x18] sm:$0x7]
    %v27 = vld [vmem:[%s2 + $0x20] sm:$0xff]
    %v28 = vld [vmem:[%s2 + $0x28] sm:$0x7]
    %v29 = vld [vmem:[%s2 + $0x30] sm:$0xff]
    %v30 = vld [vmem:[%s2 + $0x38] sm:$0x7]
    %31 = vst [vmem:[#allocation2 + $0x5] sm:$0xff] %v23
    %32 = vst [vmem:[#allocation2 + $0xd] sm:$0x7] %v24
    %33 = vst [vmem:[#allocation2 + $0x15] sm:$0xff] %v25
    %34 = vst [vmem:[#allocation2 + $0x1d] sm:$0x7] %v26
    %35 = vst [vmem:[#allocation2 + $0x25] sm:$0xff] %v27
    %36 = vst [vmem:[#allocation2 + $0x2d] sm:$0x7] %v28
    %37 = vst [vmem:[#allocation2 + $0x35] sm:$0xff] %v29
    %38 = vst [vmem:[#allocation2 + $0x3d] sm:$0x7] %v30
    %v39 = vld [vmem:[%s1] sm:$0xf]
    loop: start=0, step=1, limit=4
    $region14: #{tpu_custom_call.1} parent=1 // loop_pre_header
      _
    $region15: #{tpu_custom_call.1} parent=1 // loop_header
      %s41 = sphi 0, %s45
      %p42 = scmp.ge.s32.totalorder %s41, 4
    $region16: #{tpu_custom_call.1} parent=1 // loop_header_branch
      %44 = sbr.rel (%p42) target = $region20
    $region17: #{tpu_custom_call.1} parent=1 // loop_body
      %s46 = smul.u32 %s41, 16
      %s47 = scalar_lea.vmem [#allocation2], %s46
      %48 = vst [vmem:[%s47 + $0x1] sm:$0xf] %v39
    $region18: #{tpu_custom_call.1} parent=1 // loop_footer
      %s45 = sadd.s32 1, %s41
    $region19: #{tpu_custom_call.1} parent=1 // loop_footer_branch
      %40 = sbr.rel target = $region15
    $region20: #{tpu_custom_call.1} parent=1 // loop_exit
      _
    // Predicated region
    $region21: #{tpu_custom_call.1} parent=1 // pred_check
      _
    $region22: #{tpu_custom_call.1} parent=1 // pred_check_branch
      %50 = sbr.rel (0) target = $region24
    $region23: #{tpu_custom_call.1} parent=1 // pred_region
      %s52 = ssub.s32 1024, 1024
      %53 = vsyncadd [#allocation3], %s52
      %s54 = sshll.u32 [#allocation2], 4
      %s55 = int_to_ptr.vmem [resolvable:$true] %s54
      %60 = dma.vmem_to_hbm [thread:$0]  %s55, 1024, %s3, [#allocation3], 128, 128, 8
    $region24: #{tpu_custom_call.1} parent=1 // pred_fallthru
      _
    // Predicated region
    $region25: #{tpu_custom_call.1} parent=1 // pred_check
      _
    $region26: #{tpu_custom_call.1} parent=1 // pred_check_branch
      %62 = sbr.rel (0) target = $region28
    $region27: #{tpu_custom_call.1} parent=1 // pred_region
      %63 = dma.done [#allocation3], 1024
    $region28: #{tpu_custom_call.1} parent=1 // pred_fallthru
      _
    %64 = vsyncpa [#allocation3], 1

</llo_original>
